<compile_context>
chip_gen: v6e
topology: v6e:2x2x1
jax: 0.10.0
libtpu: 0.0.40
codegen_flags: <defaults>
</compile_context>

<pallas_src>
import jax
import jax.numpy as jnp
from jax.experimental import pallas as pl
from jax.experimental.pallas import tpu as pltpu

_COLS = 1024  # lane-dense last dim: 8 sublanes * 128 lanes


def _identity_kernel(x_ref, o_ref):
    # The KWT forward has no compute; this kernel simply copies its tile.
    o_ref[...] = x_ref[...]


def _pick_block_rows() -> int:
    """Generation-aware row-tile size for the large-input copy path."""
    try:
        kind = jax.devices()[0].device_kind.lower()
    except Exception:
        return 1024
    if "v7" in kind:
        return 2048            # 8 MiB f32 blocks; 4 bufs = 32 MiB < 64 MiB VMEM
    if "v5 lite" in kind or "v5e" in kind or "v5litepod" in kind:
        return 512             # 2 MiB blocks; 4 bufs = 8 MiB < 16 MiB default
    return 1024                # v6e / default: 4 MiB blocks


def _bytes_accessed(num_elems: int, itemsize: int) -> int:
    return 2 * num_elems * itemsize  # one HBM read + one HBM write


def _full_block_copy(x: jax.Array) -> jax.Array:
    """Identity copy of an array that fits in VMEM as ONE block (no grid)."""
    ndim = x.ndim
    return pl.pallas_call(
        _identity_kernel,
        out_shape=jax.ShapeDtypeStruct(x.shape, x.dtype),
        in_specs=[pl.BlockSpec(x.shape, lambda: (0,) * ndim)],
        out_specs=pl.BlockSpec(x.shape, lambda: (0,) * ndim),
        input_output_aliases={0: 0},
        cost_estimate=pl.CostEstimate(
            flops=0, transcendentals=0,
            bytes_accessed=_bytes_accessed(x.size, x.dtype.itemsize)),
    )(x)


def _tiled_copy_2d(x2d: jax.Array, block_rows: int) -> jax.Array:
    """Identity copy of a lane-dense (rows, 1024) array with row tiling."""
    rows, cols = x2d.shape
    steps = pl.cdiv(rows, block_rows)
    # v7x: keep an even number of grid steps so both TensorCores get work.
    try:
        kind = jax.devices()[0].device_kind.lower()
    except Exception:
        kind = ""
    if "v7" in kind and steps > 1 and steps % 2 == 1:
        block_rows = max(8, ((pl.cdiv(rows, steps + 1) + 7) // 8) * 8)
        steps = pl.cdiv(rows, block_rows)

    return pl.pallas_call(
        _identity_kernel,
        out_shape=jax.ShapeDtypeStruct((rows, cols), x2d.dtype),
        grid_spec=pltpu.PrefetchScalarGridSpec(
            num_scalar_prefetch=0,
            grid=(steps,),
            # Default double buffering: a pure copy is symmetric HBM r/w
            # bound, so deeper pipelining would only consume VMEM.
            in_specs=[pl.BlockSpec((block_rows, cols), lambda i: (i, 0))],
            out_specs=pl.BlockSpec((block_rows, cols), lambda i: (i, 0)),
        ),
        compiler_params=pltpu.CompilerParams(
            dimension_semantics=("parallel",),  # shards steps across v7x TCs
            vmem_limit_bytes=48 << 20,
        ),
        input_output_aliases={0: 0},
        cost_estimate=pl.CostEstimate(
            flops=0, transcendentals=0,
            bytes_accessed=_bytes_accessed(rows * cols, x2d.dtype.itemsize)),
    )(x2d)


def _pallas_touch(x: jax.Array) -> jax.Array:
    """Identity copy through Pallas (smoke test only; KWT.forward is a no-op).

    Small inputs: whole array as one VMEM block (no pad / reshape / slice).
    Large inputs: lane-dense row tiles over the flattened bulk, ragged last
    block masked by Pallas; any <1024-element tail via a tiny second call.
    """
    n = x.size
    block_rows = _pick_block_rows()

    if n <= block_rows * _COLS:
        return _full_block_copy(x)

    flat = x.reshape(-1)
    rows = n // _COLS
    bulk_n = rows * _COLS
    if bulk_n == n:
        out2d = _tiled_copy_2d(flat.reshape(rows, _COLS), block_rows)
        return out2d.reshape(x.shape)

    # Non-divisible size: bulk through the tiled path, tail through a tiny
    # full-block call, then stitch back together.
    bulk_out = _tiled_copy_2d(flat[:bulk_n].reshape(rows, _COLS), block_rows)
    tail_out = _full_block_copy(flat[bulk_n:])
    return jnp.concatenate([bulk_out.reshape(-1), tail_out]).reshape(x.shape)


class KWT:
    """JAX/Pallas port of arizona_spotting.models.kwt_model.KWT."""

    def __init__(self, num_classes: int = 2) -> None:
        self.num_classes = num_classes
        # TODO(synk): the reference __init__ defines no parameters and the
        # forward performs no computation; nothing further to initialize.

    def forward(self, x):
        # The reference forward performs no computation and returns None.
        # The fastest faithful implementation launches nothing at all:
        # no kernel, no HBM traffic, no host-device sync.
        return None

    __call__ = forward


def kwt_forward(x):
    return KWT(num_classes=2).forward(x)


if __name__ == "__main__":
    key = jax.random.PRNGKey(0)
    # Small NCHW input consistent with a spectrogram-style module entry point.
    x = jax.random.normal(key, (2, 4, 16, 16), dtype=jnp.float32)
    # Host copy for comparison (the Pallas call donates the input buffer via
    # input_output_aliases, so compare against a host-side snapshot).
    x_host = jax.device_get(x)

    model = KWT(num_classes=2)
    out = model(x)
    # The reference forward returns None; verify that (forward itself does no
    # device work).
    assert out is None

    # Run the Pallas identity kernel once as the smoke test and block on it.
    roundtrip = _pallas_touch(x)
    jax.block_until_ready(roundtrip)
    assert bool(jnp.array_equal(roundtrip, jnp.asarray(x_host)))

    print("KERNEL_OK")
</pallas_src>

<mosaic_0001>
module attributes {stable_mosaic.version = 11 : i64} {
  func.func @_identity_kernel(%arg0: memref<2x4x16x16xf32, #tpu.memory_space<vmem>>, %arg1: memref<2x4x16x16xf32, #tpu.memory_space<vmem>>) attributes {dimension_semantics = [], scalar_prefetch = 0 : i64, scratch_operands = 0 : i64, tpu.core_type = #tpu.core_type<tc>} {
    %c0 = arith.constant 0 : index
    %c0_0 = arith.constant 0 : index
    %c0_1 = arith.constant 0 : index
    %c0_2 = arith.constant 0 : index
    %0 = vector.load %arg0[%c0, %c0_0, %c0_1, %c0_2] : memref<2x4x16x16xf32, #tpu.memory_space<vmem>>, vector<2x4x16x16xf32>
    %c0_3 = arith.constant 0 : index
    %c0_4 = arith.constant 0 : index
    %c0_5 = arith.constant 0 : index
    %c0_6 = arith.constant 0 : index
    %1 = vector.load %arg1[%c0_3, %c0_4, %c0_5, %c0_6] : memref<2x4x16x16xf32, #tpu.memory_space<vmem>>, vector<2x4x16x16xf32>
    tpu.vector_store %arg1[%c0_3, %c0_4, %c0_5, %c0_6], %0 {strides = array<i32>} : memref<2x4x16x16xf32, #tpu.memory_space<vmem>>, vector<2x4x16x16xf32>,
    return
  }
}

</mosaic_0001>

<llo_original>
// kernel: tpu_custom_call.1
$region0: #{tpu_custom_call.1}
  #allocation0 [shape = 'u32[]', space=smem, size = 0x4, offset = 0x4, fixed_abs, tag = 'smem constant byte address 0x4 - core index']
  #allocation1 [shape = 'u32[144,128]{1,0:T(1,128)}', space=vmem, size = 0x12000, scoped, tag = 'internal scratch']
  %s0 = inlined_call_operand.hbm [shape: f32[2,4,16,16], index: 0, kind: input, shape index: {}, may-alias: {0,1}]
  %s1 = inlined_call_operand.hbm [shape: f32[2,4,16,16], index: 1, kind: output, shape index: {}, may-alias: {0,1}]
  %s2 = sld [smem:[#allocation0]]
  $region18: #{tpu_custom_call.1} parent=0
    _
  %s4 = ssub.s32 1, %s2
  %s5 = scalar_select 0, %s4, %s2
  $region1: #{tpu_custom_call.1} parent=0
    #allocation2 [shape = 'u8[65536]{0}', space=vmem, size = 0x10000, scoped, tag = 'input window, operand 0, single buffered']
    #allocation3 [shape = 's32[1]{0}', space=sflag, size = 0x4, scoped, tag = 'scoped memory for tpu_custom_call.1']
    #allocation4 [shape = 's32[1]{0}', space=sflag, size = 0x4, scoped, tag = 'scoped memory for tpu_custom_call.1']
    #allocation5 [shape = 'u8[65536]{0}', space=vmem, size = 0x10000, scoped, tag = 'output window, operand 0, single buffered']
    %6 = vsyncpa [#allocation3], 0
    %7 = vsyncpa [#allocation4], 0
    // Predicated region
    $region2: #{tpu_custom_call.1} parent=1 // pred_check
      _
    $region3: #{tpu_custom_call.1} parent=1 // pred_check_branch
      %9 = sbr.rel (0) target = $region5
    $region4: #{tpu_custom_call.1} parent=1 // pred_region
      %s11 = ssub.s32 2048, 2048
      %12 = vsyncadd [#allocation3], %s11
      %s13 = sshll.u32 [#allocation2], 4
      %s14 = int_to_ptr.vmem [resolvable:$true] %s13
      %19 = dma.hbm_to_vmem [thread:$0]  %s0, 2048, %s14, [#allocation3], 128, 128, 8
    $region5: #{tpu_custom_call.1} parent=1 // pred_fallthru
      _
    // Predicated region
    $region6: #{tpu_custom_call.1} parent=1 // pred_check
      _
    $region7: #{tpu_custom_call.1} parent=1 // pred_check_branch
      %21 = sbr.rel (0) target = $region9
    $region8: #{tpu_custom_call.1} parent=1 // pred_region
      %22 = dma.done [#allocation3], 2048
    $region9: #{tpu_custom_call.1} parent=1 // pred_fallthru
      _
    %v23 = vld [vmem:[#allocation2] sm:$0xff]
    %v24 = vld [vmem:[#allocation2 + $0x8] sm:$0xff]
    %v25 = vld [vmem:[#allocation2 + $0x10] sm:$0xff]
    %v26 = vld [vmem:[#allocation2 + $0x18] sm:$0xff]
    %v27 = vld [vmem:[#allocation2 + $0x20] sm:$0xff]
    %v28 = vld [vmem:[#allocation2 + $0x28] sm:$0xff]
    %v29 = vld [vmem:[#allocation2 + $0x30] sm:$0xff]
    %v30 = vld [vmem:[#allocation2 + $0x38] sm:$0xff]
    %v31 = vld [vmem:[#allocation2 + $0x40] sm:$0xff]
    %v32 = vld [vmem:[#allocation2 + $0x48] sm:$0xff]
    %v33 = vld [vmem:[#allocation2 + $0x50] sm:$0xff]
    %v34 = vld [vmem:[#allocation2 + $0x58] sm:$0xff]
    %v35 = vld [vmem:[#allocation2 + $0x60] sm:$0xff]
    %v36 = vld [vmem:[#allocation2 + $0x68] sm:$0xff]
    %v37 = vld [vmem:[#allocation2 + $0x70] sm:$0xff]
    %v38 = vld [vmem:[#allocation2 + $0x78] sm:$0xff]
    %vm39 = vcmask 130048
    %40 = vst.msk [vmem:[#allocation5] sm:$0xff] %vm39, %v23
    %41 = vst.msk [vmem:[#allocation5 + $0x8] sm:$0xff] %vm39, %v24
    %42 = vst.msk [vmem:[#allocation5 + $0x10] sm:$0xff] %vm39, %v25
    %43 = vst.msk [vmem:[#allocation5 + $0x18] sm:$0xff] %vm39, %v26
    %44 = vst.msk [vmem:[#allocation5 + $0x20] sm:$0xff] %vm39, %v27
    %45 = vst.msk [vmem:[#allocation5 + $0x28] sm:$0xff] %vm39, %v28
    %46 = vst.msk [vmem:[#allocation5 + $0x30] sm:$0xff] %vm39, %v29
    %47 = vst.msk [vmem:[#allocation5 + $0x38] sm:$0xff] %vm39, %v30
    %48 = vst.msk [vmem:[#allocation5 + $0x40] sm:$0xff] %vm39, %v31
    %49 = vst.msk [vmem:[#allocation5 + $0x48] sm:$0xff] %vm39, %v32
    %50 = vst.msk [vmem:[#allocation5 + $0x50] sm:$0xff] %vm39, %v33
    %51 = vst.msk [vmem:[#allocation5 + $0x58] sm:$0xff] %vm39, %v34
    %52 = vst.msk [vmem:[#allocation5 + $0x60] sm:$0xff] %vm39, %v35
    %53 = vst.msk [vmem:[#allocation5 + $0x68] sm:$0xff] %vm39, %v36
    %54 = vst.msk [vmem:[#allocation5 + $0x70] sm:$0xff] %vm39, %v37
    %55 = vst.msk [vmem:[#allocation5 + $0x78] sm:$0xff] %vm39, %v38
    // Predicated region
    $region10: #{tpu_custom_call.1} parent=1 // pred_check
      _
    $region11: #{tpu_custom_call.1} parent=1 // pred_check_branch
      %57 = sbr.rel (0) target = $region13
    $region12: #{tpu_custom_call.1} parent=1 // pred_region
      %s59 = ssub.s32 2048, 2048
      %60 = vsyncadd [#allocation4], %s59
      %s61 = sshll.u32 [#allocation5], 4
      %s62 = int_to_ptr.vmem [resolvable:$true] %s61
      %67 = dma.vmem_to_hbm [thread:$0]  %s62, 2048, %s1, [#allocation4], 128, 128, 8
    $region13: #{tpu_custom_call.1} parent=1 // pred_fallthru
      _
    // Predicated region
    $region14: #{tpu_custom_call.1} parent=1 // pred_check
      _
    $region15: #{tpu_custom_call.1} parent=1 // pred_check_branch
      %69 = sbr.rel (0) target = $region17
    $region16: #{tpu_custom_call.1} parent=1 // pred_region
      %70 = dma.done [#allocation4], 2048
    $region17: #{tpu_custom_call.1} parent=1 // pred_fallthru
      _
    %71 = vsyncpa [#allocation3], 1
    %72 = vsyncpa [#allocation4], 1

</llo_original>
